<compile_context>
chip_gen: v5e
topology: v5e:2x2
jax: 0.10.0
libtpu: 0.0.40
codegen_flags: <defaults>
</compile_context>

<pallas_src>
import functools
import math

import numpy as np
import jax
import jax.numpy as jnp
from jax.experimental import pallas as pl
from jax.experimental.pallas import tpu as pltpu


def _round_up(x: int, m: int) -> int:
    return ((x + m - 1) // m) * m


def _cdiv(a: int, b: int) -> int:
    return -(-a // b)


def _mxu_lane_target() -> int:
    """256-wide tiles fill the 2x256x256 MXU on v6e/v7x; 128 elsewhere (v4/v5e)."""
    try:
        kind = jax.devices()[0].device_kind.lower()
    except Exception:
        return 128
    return 256 if ("v6" in kind or "v7" in kind or "7x" in kind) else 128


def _choose_tile(n: int, n_sub: int, target: int) -> int:
    """Row tile: multiple of 16, >= n_sub - 1, <= target.
    Minimize tail padding, prefer >=2 grid steps (megacore), then larger tiles."""
    lo = _round_up(max(16, n_sub - 1), 16)
    hi = max(target, lo)
    best_key, best_t = None, lo
    t = lo
    while t <= hi:
        pad = _round_up(max(n, 1), t)
        key = (pad, 0 if pad // t >= 2 else 1, -t)
        if best_key is None or key < best_key:
            best_key, best_t = key, t
        t += 16
    return best_t


# ----------------------------------------------------------------------------
# Parameter construction (deterministic numpy glue)
# ----------------------------------------------------------------------------

def build_polyphase_resampler(sr_in: int, sr_out: int,
                              zero_crossings: int = 16, lane: int = 128):
    """Banded polyphase windowed-sinc resampler.

    y[m] = sum_i x[i] * h(i - m * sr_in / sr_out), evaluated block-wise:
    output block q (blk = r*up samples) reads hop_in = r*down input samples per
    row chunk j, so  Y[q] = sum_j X2[q + j] @ Rb[j*hop_in:(j+1)*hop_in]  with
    X2 = left-padded signal reshaped into rows of hop_in samples.
    """
    g = math.gcd(sr_in, sr_out)
    up, down = sr_out // g, sr_in // g
    scale = sr_out / sr_in
    cutoff = min(1.0, scale)
    half_width = zero_crossings / cutoff

    r = _cdiv(lane, up)
    blk = r * up                       # output samples per block
    hop_in = r * down                  # input-sample stride per block (row width)
    left = int(np.floor(-half_width))
    right = int(np.ceil((blk - 1) * down / up + half_width))
    l_in = right - left + 1            # input support per block
    n_sub = _cdiv(l_in, hop_in)        # hop_in-row chunks per block (2-3 typical)
    k_pad = n_sub * hop_in
    b_pad = _round_up(blk, 128)        # lane-dense output columns

    rb = np.zeros((k_pad, b_pad), dtype=np.float64)
    n = np.arange(l_in, dtype=np.float64)[:, None] + left
    b = np.arange(blk, dtype=np.float64)[None, :]
    x = n - b * down / up
    win = np.where(np.abs(x) <= half_width,
                   0.5 * (1.0 + np.cos(np.pi * x / half_width)), 0.0)
    rb[:l_in, :blk] = cutoff * np.sinc(cutoff * x) * win
    geom = dict(blk=blk, hop_in=hop_in, left=left, n_sub=n_sub, b_pad=b_pad)
    return rb.astype(np.float32), geom


def build_stft_matrices_packed(n_fft: int, hop: int, f_pad: int):
    """Hann-windowed real DFT, cos | -sin packed side by side.

    Rows are zero-padded to n_sub*hop so frame t is computed as
    sum_j X2[t+j] @ CS[j*hop:(j+1)*hop].  The Nyquist bin is dropped (its mel
    weight is exactly 0 for f_max = sr/2), so only n_fft//2 bins are produced.
    """
    n_freq = n_fft // 2
    n_sub = _cdiv(n_fft, hop)
    k_pad = n_sub * hop
    n = np.arange(n_fft, dtype=np.float64)
    win = 0.5 - 0.5 * np.cos(2.0 * np.pi * n / n_fft)            # periodic hann
    k = np.arange(n_freq, dtype=np.float64)[:, None]
    ang = 2.0 * np.pi * k * n[None, :] / n_fft
    cs = np.zeros((k_pad, 2 * f_pad), dtype=np.float64)
    cs[:n_fft, :n_freq] = (np.cos(ang) * win[None, :]).T
    cs[:n_fft, f_pad:f_pad + n_freq] = (-np.sin(ang) * win[None, :]).T
    return cs.astype(np.float32), n_sub


def build_mel_fb(sr: int, n_fft: int, n_mels: int, f_min: float,
                 f_pad: int, n_mels_pad: int, f_max: float | None = None):
    """Slaney mel-scale triangular filterbank with slaney area normalization
    (librosa.filters.mel defaults), transposed to [f_pad, n_mels_pad] f32.
    The Nyquist row is dropped (its weight is 0 for f_max = sr/2)."""
    if f_max is None:
        f_max = sr / 2.0
    n_freq = n_fft // 2 + 1

    f_sp = 200.0 / 3.0
    min_log_hz = 1000.0
    min_log_mel = min_log_hz / f_sp
    logstep = np.log(6.4) / 27.0

    def hz_to_mel(f):
        f = np.asarray(f, dtype=np.float64)
        return np.where(f >= min_log_hz,
                        min_log_mel + np.log(np.maximum(f, 1e-10) / min_log_hz) / logstep,
                        f / f_sp)

    def mel_to_hz(m):
        m = np.asarray(m, dtype=np.float64)
        return np.where(m >= min_log_mel,
                        min_log_hz * np.exp(logstep * (m - min_log_mel)),
                        f_sp * m)

    mels = np.linspace(hz_to_mel(f_min), hz_to_mel(f_max), n_mels + 2)
    hz = mel_to_hz(mels)
    bins = np.linspace(0.0, sr / 2.0, n_freq)
    fb = np.zeros((n_mels, n_freq), dtype=np.float64)
    for i in range(n_mels):
        lower = (bins - hz[i]) / max(hz[i + 1] - hz[i], 1e-8)
        upper = (hz[i + 2] - bins) / max(hz[i + 2] - hz[i + 1], 1e-8)
        fb[i] = np.maximum(0.0, np.minimum(lower, upper))
    enorm = 2.0 / (hz[2:n_mels + 2] - hz[:n_mels])                # slaney area norm
    fb *= enorm[:, None]

    out = np.zeros((f_pad, n_mels_pad), dtype=np.float64)
    keep = min(n_fft // 2, f_pad)                                 # drop Nyquist column
    out[:keep, :n_mels] = fb.T[:keep]
    return out.astype(np.float32)


# ----------------------------------------------------------------------------
# Pallas kernels
# ----------------------------------------------------------------------------

def _windowed_dot_acc(x0_ref, x1_ref, f_ref, n_sub, hop):
    """acc[t] = sum_j slab[t + j] @ F[j*hop:(j+1)*hop]   (f32 accumulation).

    slab = [x0 ; x1] holds rows [i*tile, (i+2)*tile) of the hop-reshaped signal,
    so every shifted [tile, hop] window (offset j < n_sub <= tile + 1) is VMEM
    resident -- fused framing, no HBM gather and no materialized frames array.
    """
    tile = x0_ref.shape[0]
    slab = jnp.concatenate([x0_ref[...].astype(jnp.float32),
                            x1_ref[...].astype(jnp.float32)], axis=0)
    acc = None
    for j in range(n_sub):                     # static unroll; n_sub is small (2-13)
        lhs = slab[j:j + tile, :].astype(jnp.bfloat16)
        d = jnp.dot(lhs, f_ref[j * hop:(j + 1) * hop, :],
                    preferred_element_type=jnp.float32)
        acc = d if acc is None else acc + d
    return acc


def _resample_kernel(x0_ref, x1_ref, rb_ref, o_ref, *, n_sub, hop):
    acc = _windowed_dot_acc(x0_ref, x1_ref, rb_ref, n_sub, hop)
    o_ref[...] = acc.astype(o_ref.dtype)        # bf16 writeback (feeds bf16 DFT)


def _stft_mel_kernel(x0_ref, x1_ref, cs_ref, mel_ref, o_ref, *, n_sub, hop, f_pad):
    reim = _windowed_dot_acc(x0_ref, x1_ref, cs_ref, n_sub, hop)  # [tile, 2*f_pad] f32
    re = reim[:, :f_pad]
    im = reim[:, f_pad:]
    power = re * re + im * im                                     # |spec|^2, f32 (VPU)
    # Mel projection kept in f32 (accuracy); K <= 1024, N = 128 -> negligible MXU cost.
    o_ref[...] = jnp.dot(power, mel_ref[...], preferred_element_type=jnp.float32)


_VMEM_LIMIT = 32 << 20   # portable to v7x (64 MiB VMEM); not binding at these sizes.
                         # TODO(synk): raise to 64-96 MiB on v5e/v6e for larger n_fft.


def resample_pallas(x2, rb, *, tile_q, nb_pad, n_sub, hop_in):
    k_pad, b_pad = rb.shape
    kernel = functools.partial(_resample_kernel, n_sub=n_sub, hop=hop_in)
    return pl.pallas_call(
        kernel,
        out_shape=jax.ShapeDtypeStruct((nb_pad, b_pad), jnp.bfloat16),
        grid=(nb_pad // tile_q,),
        in_specs=[pl.BlockSpec((tile_q, hop_in), lambda i: (i, 0)),
                  pl.BlockSpec((tile_q, hop_in), lambda i: (i + 1, 0)),   # halo view
                  pl.BlockSpec((k_pad, b_pad), lambda i: (0, 0))],
        out_specs=pl.BlockSpec((tile_q, b_pad), lambda i: (i, 0)),
        compiler_params=pltpu.CompilerParams(
            dimension_semantics=("parallel",),
            vmem_limit_bytes=_VMEM_LIMIT),
    )(x2, x2, rb)


def stft_mel_pallas(x2, cs, mel_fb, *, tile_t, t_pad, n_sub, hop, f_pad):
    k_pad, two_f_pad = cs.shape
    n_mels_pad = mel_fb.shape[1]
    kernel = functools.partial(_stft_mel_kernel, n_sub=n_sub, hop=hop, f_pad=f_pad)
    return pl.pallas_call(
        kernel,
        out_shape=jax.ShapeDtypeStruct((t_pad, n_mels_pad), jnp.float32),
        grid=(t_pad // tile_t,),
        in_specs=[pl.BlockSpec((tile_t, hop), lambda i: (i, 0)),
                  pl.BlockSpec((tile_t, hop), lambda i: (i + 1, 0)),      # halo view
                  pl.BlockSpec((k_pad, two_f_pad), lambda i: (0, 0)),
                  pl.BlockSpec((f_pad, n_mels_pad), lambda i: (0, 0))],
        out_specs=pl.BlockSpec((tile_t, n_mels_pad), lambda i: (i, 0)),
        compiler_params=pltpu.CompilerParams(
            dimension_semantics=("parallel",),
            vmem_limit_bytes=_VMEM_LIMIT),
    )(x2, x2, cs, mel_fb)


# ----------------------------------------------------------------------------
# Wav2Mel forward (wrapper / glue)
# ----------------------------------------------------------------------------

def wav2mel(wav, *, sample_rate: int, resample_rate: int,
            hop_length: int, n_fft: int, n_mels: int, f_min: float = 0.0):
    """wav: (1, N) float32  ->  mel power spectrogram (1, n_mels, n_frames) f32."""
    wav = wav.astype(jnp.float32)
    n_in = wav.shape[1]
    lane = _mxu_lane_target()

    # ---- 1) banded polyphase resample (fused block extraction, no gather) ----
    rb_np, geo = build_polyphase_resampler(sample_rate, resample_rate, lane=lane)
    blk, hop_in, n_sub_rs = geo["blk"], geo["hop_in"], geo["n_sub"]
    pad_left = -geo["left"]

    n_out = _cdiv(n_in * resample_rate, sample_rate)      # librosa/torchaudio ceil
    n_blocks = _cdiv(n_out, blk)
    tile_q = _choose_tile(n_blocks, n_sub_rs, lane)
    nb_pad = _round_up(n_blocks, tile_q)
    n_rows_rs = max(nb_pad + tile_q, _cdiv(pad_left + n_in, hop_in))
    x2_rs = jnp.pad(wav[0], (pad_left, n_rows_rs * hop_in - pad_left - n_in)
                    ).reshape(n_rows_rs, hop_in)
    rb = jnp.asarray(rb_np, dtype=jnp.bfloat16)

    y_blocks = resample_pallas(x2_rs, rb, tile_q=tile_q, nb_pad=nb_pad,
                               n_sub=n_sub_rs, hop_in=hop_in)        # bf16
    y = y_blocks[:n_blocks, :blk].reshape(-1)[:n_out]                # bf16 [n_out]

    # ---- 2) center=True reflect pad + hop-row reshape (cheap XLA, no gather) --
    f_pad = _round_up(n_fft // 2, 128)        # Nyquist dropped: its mel weight == 0
    n_mels_pad = _round_up(n_mels, 128)
    cs_np, n_sub_fft = build_stft_matrices_packed(n_fft, hop_length, f_pad)
    mel_np = build_mel_fb(resample_rate, n_fft, n_mels, f_min, f_pad, n_mels_pad)

    pad = n_fft // 2
    y_ref = jnp.pad(y, (pad, pad), mode="reflect")
    n_frames = 1 + n_out // hop_length
    tile_t = _choose_tile(n_frames, n_sub_fft, lane)
    t_pad = _round_up(n_frames, tile_t)
    n_rows = max(t_pad + tile_t, _cdiv(n_out + n_fft, hop_length))
    x2 = jnp.pad(y_ref, (0, n_rows * hop_length - y_ref.shape[0])
                 ).reshape(n_rows, hop_length)

    # ---- 3) fused framing + windowed DFT + |.|^2 + mel projection (Pallas) ---
    mel_tm = stft_mel_pallas(x2,
                             jnp.asarray(cs_np, dtype=jnp.bfloat16),
                             jnp.asarray(mel_np, dtype=jnp.float32),
                             tile_t=tile_t, t_pad=t_pad, n_sub=n_sub_fft,
                             hop=hop_length, f_pad=f_pad)            # [t_pad, 128] f32

    # back to librosa convention (1, n_mels, n_frames)
    return mel_tm[:n_frames, :n_mels].T[None, :, :]


# ----------------------------------------------------------------------------

if __name__ == "__main__":
    key = jax.random.PRNGKey(0)

    # Small, self-consistent config (module defaults scaled down for the test).
    sample_rate = 8000
    resample_rate = 4000
    n_fft = 256
    hop_length = 64
    n_mels = 32
    n_samples = 2048

    wav = jax.random.normal(key, (1, n_samples), dtype=jnp.float32)

    mel = wav2mel(wav,
                  sample_rate=sample_rate,
                  resample_rate=resample_rate,
                  hop_length=hop_length,
                  n_fft=n_fft,
                  n_mels=n_mels)
    mel = jax.block_until_ready(mel)

    n_out = -(-n_samples * resample_rate // sample_rate)
    expected_frames = 1 + n_out // hop_length
    assert mel.shape == (1, n_mels, expected_frames), mel.shape
    assert mel.dtype == jnp.float32
    assert bool(jnp.all(jnp.isfinite(mel)))

    print("KERNEL_OK")
</pallas_src>

<mosaic_0001>
module attributes {stable_mosaic.version = 11 : i64} {
  func.func @_resample_kernel(%arg0: i32, %arg1: memref<16x256xf32, #tpu.memory_space<vmem>>, %arg2: memref<16x256xf32, #tpu.memory_space<vmem>>, %arg3: memref<512x128xbf16, #tpu.memory_space<vmem>>, %arg4: memref<16x128xbf16, #tpu.memory_space<vmem>>) attributes {dimension_semantics = [#tpu.dimension_semantics<parallel>], iteration_bounds = array<i64: 1>, scalar_prefetch = 0 : i64, scratch_operands = 0 : i64, tpu.core_type = #tpu.core_type<tc>, window_params = [{transform_indices = @transform_0, window_bounds = array<i64: 16, 256>}, {transform_indices = @transform_1, window_bounds = array<i64: 16, 256>}, {pipeline_mode = #tpu.pipeline_mode<synchronous>, transform_indices = @transform_2, window_bounds = array<i64: 512, 128>}, {transform_indices = @transform_3, window_bounds = array<i64: 16, 128>}]} {
    %c0 = arith.constant 0 : index
    %c0_0 = arith.constant 0 : index
    %0 = vector.load %arg1[%c0, %c0_0] : memref<16x256xf32, #tpu.memory_space<vmem>>, vector<16x256xf32>
    %c0_1 = arith.constant 0 : index
    %c0_2 = arith.constant 0 : index
    %1 = vector.load %arg2[%c0_1, %c0_2] : memref<16x256xf32, #tpu.memory_space<vmem>>, vector<16x256xf32>
    %2 = tpu.concatenate %0, %1 in 0 : vector<16x256xf32>, vector<16x256xf32> -> vector<32x256xf32>
    %3 = vector.extract_strided_slice %2 {offsets = [0, 0], sizes = [16, 256], strides = [1, 1]} : vector<32x256xf32> to vector<16x256xf32>
    %4 = arith.truncf %3 : vector<16x256xf32> to vector<16x256xbf16>
    %c0_3 = arith.constant 0 : index
    %c0_4 = arith.constant 0 : index
    %5 = vector.load %arg3[%c0_3, %c0_4] : memref<512x128xbf16, #tpu.memory_space<vmem>>, vector<256x128xbf16>
    %cst = arith.constant dense<0.000000e+00> : vector<16x128xf32>
    %6 = tpu.matmul %4, %5, %cst {dimension_numbers = #tpu.dot_dimension_numbers<[1], [0], [0], [1], [0, 0, 1, 1], [], []>} : vector<16x256xbf16>, vector<256x128xbf16>, vector<16x128xf32> -> vector<16x128xf32>
    %7 = vector.extract_strided_slice %2 {offsets = [1, 0], sizes = [16, 256], strides = [1, 1]} : vector<32x256xf32> to vector<16x256xf32>
    %8 = arith.truncf %7 : vector<16x256xf32> to vector<16x256xbf16>
    %c256 = arith.constant 256 : index
    %c0_5 = arith.constant 0 : index
    %9 = vector.load %arg3[%c256, %c0_5] : memref<512x128xbf16, #tpu.memory_space<vmem>>, vector<256x128xbf16>
    %cst_6 = arith.constant dense<0.000000e+00> : vector<16x128xf32>
    %10 = tpu.matmul %8, %9, %cst_6 {dimension_numbers = #tpu.dot_dimension_numbers<[1], [0], [0], [1], [0, 0, 1, 1], [], []>} : vector<16x256xbf16>, vector<256x128xbf16>, vector<16x128xf32> -> vector<16x128xf32>
    %11 = arith.addf %6, %10 : vector<16x128xf32>
    %12 = arith.truncf %11 : vector<16x128xf32> to vector<16x128xbf16>
    %c0_7 = arith.constant 0 : index
    %c0_8 = arith.constant 0 : index
    %13 = vector.load %arg4[%c0_7, %c0_8] : memref<16x128xbf16, #tpu.memory_space<vmem>>, vector<16x128xbf16>
    tpu.vector_store %arg4[%c0_7, %c0_8], %12 {strides = array<i32>} : memref<16x128xbf16, #tpu.memory_space<vmem>>, vector<16x128xbf16>,
    return
  }
  func.func @transform_0(%arg0: i32) -> (i32, i32) {
    %c0_i32 = arith.constant 0 : i32
    %c0_i32_0 = arith.constant 0 : i32
    return %arg0, %c0_i32 : i32, i32
  }
  func.func @transform_1(%arg0: i32) -> (i32, i32) {
    %c1_i32 = arith.constant 1 : i32
    %0 = arith.addi %arg0, %c1_i32 : i32
    %c0_i32 = arith.constant 0 : i32
    %c0_i32_0 = arith.constant 0 : i32
    return %0, %c0_i32 : i32, i32
  }
  func.func @transform_2(%arg0: i32) -> (i32, i32) {
    %c0_i32 = arith.constant 0 : i32
    %c0_i32_0 = arith.constant 0 : i32
    %c0_i32_1 = arith.constant 0 : i32
    return %c0_i32, %c0_i32_0 : i32, i32
  }
  func.func @transform_3(%arg0: i32) -> (i32, i32) {
    %c0_i32 = arith.constant 0 : i32
    %c0_i32_0 = arith.constant 0 : i32
    return %arg0, %c0_i32 : i32, i32
  }
}

</mosaic_0001>

<llo_original>
// kernel: tpu_custom_call.1
$region0: #{tpu_custom_call.1}
  #allocation0 [shape = 'u32[]', space=smem, size = 0x4, offset = 0x4, fixed_abs, tag = 'smem constant byte address 0x4 - core index']
  #allocation1 [shape = 'u32[72,128]{1,0:T(1,128)}', space=vmem, size = 0x9000, scoped, tag = 'internal scratch']
  %s0 = inlined_call_operand.hbm [shape: f32[32,256], index: 0, kind: input, shape index: {}]
  %s1 = inlined_call_operand.hbm [shape: f32[32,256], index: 1, kind: input, shape index: {}]
  %s2 = inlined_call_operand.hbm [shape: bf16[512,128], index: 2, kind: input, shape index: {}]
  %s3 = inlined_call_operand.hbm [shape: bf16[16,128], index: 3, kind: output, shape index: {}]
  %s4 = sld [smem:[#allocation0]]
  $region34: #{tpu_custom_call.1} parent=0
    _
  %s6 = ssub.s32 1, %s4
  %s7 = scalar_select 0, %s6, %s4
  $region1: #{tpu_custom_call.1} parent=0
    #allocation2 [shape = 'u8[16384]{0}', space=vmem, size = 0x4000, scoped, tag = 'input window, operand 0, single buffered']
    #allocation3 [shape = 's32[1]{0}', space=sflag, size = 0x4, scoped, tag = 'scoped memory for tpu_custom_call.1']
    #allocation4 [shape = 's32[1]{0}', space=sflag, size = 0x4, scoped, tag = 'scoped memory for tpu_custom_call.1']
    #allocation5 [shape = 'u8[16384]{0}', space=vmem, size = 0x4000, scoped, tag = 'input window, operand 1, single buffered']
    #allocation6 [shape = 's32[1]{0}', space=sflag, size = 0x4, scoped, tag = 'scoped memory for tpu_custom_call.1']
    #allocation7 [shape = 'u8[131072]{0}', space=vmem, size = 0x20000, scoped, tag = 'input window, operand 2, single buffered']
    #allocation8 [shape = 'u8[4096]{0}', space=vmem, size = 0x1000, scoped, tag = 'output window, operand 0, single buffered']
    %8 = vsyncpa [#allocation3], 0
    %9 = vsyncpa [#allocation6], 0
    %10 = vsyncpa [#allocation4], 0
    // Predicated region
    $region2: #{tpu_custom_call.1} parent=1 // pred_check
      _
    $region3: #{tpu_custom_call.1} parent=1 // pred_check_branch
      %12 = sbr.rel (0) target = $region5
    $region4: #{tpu_custom_call.1} parent=1 // pred_region
      %14 = vsyncadd [#allocation3], 0
      %s15 = sshll.u32 %s0, 4
      %s16 = int_to_ptr.hbm [resolvable:$true] %s15
      %s17 = sshll.u32 [#allocation2], 4
      %s18 = int_to_ptr.vmem [resolvable:$true] %s17
      %23 = dma.hbm_to_vmem [thread:$0]  %s16, 512, %s18, [#allocation3], 256, 256, 16
    $region5: #{tpu_custom_call.1} parent=1 // pred_fallthru
      _
    // Predicated region
    $region6: #{tpu_custom_call.1} parent=1 // pred_check
      _
    $region7: #{tpu_custom_call.1} parent=1 // pred_check_branch
      %25 = sbr.rel (0) target = $region9
    $region8: #{tpu_custom_call.1} parent=1 // pred_region
      %s26 = sadd.s32 0, 1
      %s27 = smul.u32 2, %s26
      %29 = vsyncadd [#allocation6], 0
      %s30 = smul.addr %s27, 2
      %s31 = smul.addr %s30, 8
      %s32 = scalar_lea.hbm %s1, %s31
      %s33 = sshll.u32 %s32, 4
      %s34 = int_to_ptr.hbm [resolvable:$true] %s33
      %s35 = sshll.u32 [#allocation5], 4
      %s36 = int_to_ptr.vmem [resolvable:$true] %s35
      %41 = dma.hbm_to_vmem [thread:$0]  %s34, 512, %s36, [#allocation6], 256, 256, 16
    $region9: #{tpu_custom_call.1} parent=1 // pred_fallthru
      _
    // Predicated region
    $region10: #{tpu_custom_call.1} parent=1 // pred_check
      _
    $region11: #{tpu_custom_call.1} parent=1 // pred_check_branch
      %43 = sbr.rel (0) target = $region13
    $region12: #{tpu_custom_call.1} parent=1 // pred_region
      %45 = vsyncadd [#allocation6], 0
      %s46 = sshll.u32 %s2, 4
      %s47 = int_to_ptr.hbm [resolvable:$true] %s46
      %s48 = sshll.u32 [#allocation7], 4
      %s49 = int_to_ptr.vmem [resolvable:$true] %s48
      %54 = dma.hbm_to_vmem [thread:$0]  %s47, 4096, %s49, [#allocation6], 64, 64, 4
    $region13: #{tpu_custom_call.1} parent=1 // pred_fallthru
      _
    // Predicated region
    $region14: #{tpu_custom_call.1} parent=1 // pred_check
      _
    $region15: #{tpu_custom_call.1} parent=1 // pred_check_branch
      %56 = sbr.rel (0) target = $region17
    $region16: #{tpu_custom_call.1} parent=1 // pred_region
      %58 = dma.done [#allocation3], 512
    $region17: #{tpu_custom_call.1} parent=1 // pred_fallthru
      _
    // Predicated region
    $region18: #{tpu_custom_call.1} parent=1 // pred_check
      _
    $region19: #{tpu_custom_call.1} parent=1 // pred_check_branch
      %60 = sbr.rel (0) target = $region21
    $region20: #{tpu_custom_call.1} parent=1 // pred_region
      %62 = dma.done [#allocation6], 512
    $region21: #{tpu_custom_call.1} parent=1 // pred_fallthru
      _
    // Predicated region
    $region22: #{tpu_custom_call.1} parent=1 // pred_check
      _
    $region23: #{tpu_custom_call.1} parent=1 // pred_check_branch
      %64 = sbr.rel (0) target = $region25
    $region24: #{tpu_custom_call.1} parent=1 // pred_region
      %66 = dma.done [#allocation6], 4096
    $region25: #{tpu_custom_call.1} parent=1 // pred_fallthru
      _
    %s67 = sadd.s32 0, 1
    %s68 = smul.u32 2, %s67
    %v69 = vld [vmem:[#allocation2] sm:$0xff]
    %v70 = vld [vmem:[#allocation2 + $0x8] sm:$0xff]
    %v71 = vld [vmem:[#allocation2 + $0x10] sm:$0xff]
    %v72 = vld [vmem:[#allocation2 + $0x18] sm:$0xff]
    %v73 = vld [vmem:[#allocation5] sm:$0xff]
    %v74 = vld [vmem:[#allocation5 + $0x8] sm:$0xff]
    %v75 = vpack.c.bf16 %v71, %v69
    %v76 = vpack.c.bf16 %v72, %v70
    %v77 = vld [vmem:[#allocation7] sm:$0xf]
    %v78 = vld [vmem:[#allocation7 + $0x4] sm:$0xf]
    %v79 = vld [vmem:[#allocation7 + $0x8] sm:$0xf]
    %v80 = vld [vmem:[#allocation7 + $0xc] sm:$0xf]
    %v81 = vld [vmem:[#allocation7 + $0x10] sm:$0xf]
    %v82 = vld [vmem:[#allocation7 + $0x14] sm:$0xf]
    %v83 = vld [vmem:[#allocation7 + $0x18] sm:$0xf]
    %v84 = vld [vmem:[#allocation7 + $0x1c] sm:$0xf]
    %v85 = vld [vmem:[#allocation7 + $0x20] sm:$0xf]
    %v86 = vld [vmem:[#allocation7 + $0x24] sm:$0xf]
    %v87 = vld [vmem:[#allocation7 + $0x28] sm:$0xf]
    %v88 = vld [vmem:[#allocation7 + $0x2c] sm:$0xf]
    %v89 = vld [vmem:[#allocation7 + $0x30] sm:$0xf]
    %v90 = vld [vmem:[#allocation7 + $0x34] sm:$0xf]
    %v91 = vld [vmem:[#allocation7 + $0x38] sm:$0xf]
    %v92 = vld [vmem:[#allocation7 + $0x3c] sm:$0xf]
    %v93 = vld [vmem:[#allocation7 + $0x40] sm:$0xf]
    %v94 = vld [vmem:[#allocation7 + $0x44] sm:$0xf]
    %v95 = vld [vmem:[#allocation7 + $0x48] sm:$0xf]
    %v96 = vld [vmem:[#allocation7 + $0x4c] sm:$0xf]
    %v97 = vld [vmem:[#allocation7 + $0x50] sm:$0xf]
    %v98 = vld [vmem:[#allocation7 + $0x54] sm:$0xf]
    %v99 = vld [vmem:[#allocation7 + $0x58] sm:$0xf]
    %v100 = vld [vmem:[#allocation7 + $0x5c] sm:$0xf]
    %v101 = vld [vmem:[#allocation7 + $0x60] sm:$0xf]
    %v102 = vld [vmem:[#allocation7 + $0x64] sm:$0xf]
    %v103 = vld [vmem:[#allocation7 + $0x68] sm:$0xf]
    %v104 = vld [vmem:[#allocation7 + $0x6c] sm:$0xf]
    %v105 = vld [vmem:[#allocation7 + $0x70] sm:$0xf]
    %v106 = vld [vmem:[#allocation7 + $0x74] sm:$0xf]
    %v107 = vld [vmem:[#allocation7 + $0x78] sm:$0xf]
    %v108 = vld [vmem:[#allocation7 + $0x7c] sm:$0xf]
    %v109 = vpack.c.bf16 %v73, %v73
    %v110 = vpack.c.bf16 %v74, %v74
    %v111 = vld [vmem:[#allocation7 + $0x80] sm:$0xf]
    %v112 = vld [vmem:[#allocation7 + $0x84] sm:$0xf]
    %v113 = vld [vmem:[#allocation7 + $0x88] sm:$0xf]
    %v114 = vld [vmem:[#allocation7 + $0x8c] sm:$0xf]
    %v115 = vld [vmem:[#allocation7 + $0x90] sm:$0xf]
    %v116 = vld [vmem:[#allocation7 + $0x94] sm:$0xf]
    %v117 = vld [vmem:[#allocation7 + $0x98] sm:$0xf]
    %v118 = vld [vmem:[#allocation7 + $0x9c] sm:$0xf]
    %v119 = vld [vmem:[#allocation7 + $0xa0] sm:$0xf]
    %v120 = vld [vmem:[#allocation7 + $0xa4] sm:$0xf]
    %v121 = vld [vmem:[#allocation7 + $0xa8] sm:$0xf]
    %v122 = vld [vmem:[#allocation7 + $0xac] sm:$0xf]
    %v123 = vld [vmem:[#allocation7 + $0xb0] sm:$0xf]
    %v124 = vld [vmem:[#allocation7 + $0xb4] sm:$0xf]
    %v125 = vld [vmem:[#allocation7 + $0xb8] sm:$0xf]
    %v126 = vld [vmem:[#allocation7 + $0xbc] sm:$0xf]
    %v127 = vld [vmem:[#allocation7 + $0xc0] sm:$0xf]
    %v128 = vld [vmem:[#allocation7 + $0xc4] sm:$0xf]
    %v129 = vld [vmem:[#allocation7 + $0xc8] sm:$0xf]
    %v130 = vld [vmem:[#allocation7 + $0xcc] sm:$0xf]
    %v131 = vld [vmem:[#allocation7 + $0xd0] sm:$0xf]
    %v132 = vld [vmem:[#allocation7 + $0xd4] sm:$0xf]
    %v133 = vld [vmem:[#allocation7 + $0xd8] sm:$0xf]
    %v134 = vld [vmem:[#allocation7 + $0xdc] sm:$0xf]
    %v135 = vld [vmem:[#allocation7 + $0xe0] sm:$0xf]
    %v136 = vld [vmem:[#allocation7 + $0xe4] sm:$0xf]
    %v137 = vld [vmem:[#allocation7 + $0xe8] sm:$0xf]
    %v138 = vld [vmem:[#allocation7 + $0xec] sm:$0xf]
    %v139 = vld [vmem:[#allocation7 + $0xf0] sm:$0xf]
    %v140 = vld [vmem:[#allocation7 + $0xf4] sm:$0xf]
    %v141 = vld [vmem:[#allocation7 + $0xf8] sm:$0xf]
    %v142 = vld [vmem:[#allocation7 + $0xfc] sm:$0xf]
    %vm143 = vsmask.f32 7424
    %v145 = vshrl.u32 %v75, 16
    %v147 = vshll.u32 %v75, 16
    %v149 = vrot.slane %v147, 1
    %v150 = vor.u32 %v145, %v149
    %v152 = vshll.u32 %v109, 16
    %v154 = vrot.slane %v152, 1
    %v155 = vsel %vm143, %v150, %v154
    %v157 = vshrl.u32 %v76, 16
    %v159 = vshll.u32 %v76, 16
    %v161 = vrot.slane %v159, 1
    %v162 = vor.u32 %v157, %v161
    %v164 = vshll.u32 %v110, 16
    %v166 = vrot.slane %v164, 1
    %v167 = vsel %vm143, %v162, %v166
    %v202 = vunpack.c.l.b16 %v111
    %v203 = vunpack.c.l.b16 %v112
    %v204 = vunpack.c.l.b16 %v113
    %v205 = vunpack.c.l.b16 %v114
    %v206 = vunpack.c.l.b16 %v115
    %v207 = vunpack.c.l.b16 %v116
    %v208 = vunpack.c.l.b16 %v117
    %v209 = vunpack.c.l.b16 %v118
    %v210 = vunpack.c.l.b16 %v119
    %v211 = vunpack.c.l.b16 %v120
    %v212 = vunpack.c.l.b16 %v121
    %v213 = vunpack.c.l.b16 %v122
    %v214 = vunpack.c.l.b16 %v123
    %v215 = vunpack.c.l.b16 %v124
    %v216 = vunpack.c.l.b16 %v125
    %v217 = vunpack.c.l.b16 %v126
    %v218 = vunpack.c.l.b16 %v127
    %v219 = vunpack.c.l.b16 %v128
    %v220 = vunpack.c.l.b16 %v129
    %v221 = vunpack.c.l.b16 %v130
    %v222 = vunpack.c.l.b16 %v131
    %v223 = vunpack.c.l.b16 %v132
    %v224 = vunpack.c.l.b16 %v133
    %v225 = vunpack.c.l.b16 %v134
    %v226 = vunpack.c.l.b16 %v135
    %v227 = vunpack.c.l.b16 %v136
    %v228 = vunpack.c.l.b16 %v137
    %v229 = vunpack.c.l.b16 %v138
    %v230 = vunpack.c.l.b16 %v139
    %v231 = vunpack.c.l.b16 %v140
    %v232 = vunpack.c.l.b16 %v141
    %v233 = vunpack.c.l.b16 %v142
    %v234 = vpack.c.b16 %v203, %v202
    %v235 = vpack.c.b16 %v205, %v204
    %v236 = vpack.c.b16 %v207, %v206
    %v237 = vpack.c.b16 %v209, %v208
    %v238 = vpack.c.b16 %v211, %v210
    %v239 = vpack.c.b16 %v213, %v212
    %v240 = vpack.c.b16 %v215, %v214
    %v241 = vpack.c.b16 %v217, %v216
    %v242 = vpack.c.b16 %v219, %v218
    %v243 = vpack.c.b16 %v221, %v220
    %v244 = vpack.c.b16 %v223, %v222
    %v245 = vpack.c.b16 %v225, %v224
    %v246 = vpack.c.b16 %v227, %v226
    %v247 = vpack.c.b16 %v229, %v228
    %v248 = vpack.c.b16 %v231, %v230
    %v249 = vpack.c.b16 %v233, %v232
    %266 = vmatpush.bf16.msra.mxu0 %v241
    %267 = vmatpush.bf16.msra.mxu0 %v240
    %268 = vmatpush.bf16.msra.mxu0 %v239
    %269 = vmatpush.bf16.msra.mxu0 %v238
    %270 = vmatpush.bf16.msra.mxu0 %v237
    %271 = vmatpush.bf16.msra.mxu0 %v236
    %272 = vmatpush.bf16.msra.mxu0 %v235
    %273 = vmatpush.bf16.msra.mxu0 %v234
    %274 = vmatmul.bf16.gmra.mxu0 %v155
    %v275 = vpop.f32.mrf.mxu0
    %v276 = vadd.f32 0.0, %v275
    %v277 = vpop.f32.mrf.mxu0
    %v278 = vadd.f32 0.0, %v277
    %279 = vdwg.mxu0
    %280 = vmatpush.bf16.msra.mxu0 %v249
    %281 = vmatpush.bf16.msra.mxu0 %v248
    %282 = vmatpush.bf16.msra.mxu0 %v247
    %283 = vmatpush.bf16.msra.mxu0 %v246
    %284 = vmatpush.bf16.msra.mxu0 %v245
    %285 = vmatpush.bf16.msra.mxu0 %v244
    %286 = vmatpush.bf16.msra.mxu0 %v243
    %287 = vmatpush.bf16.msra.mxu0 %v242
    %288 = vmatmul.bf16.gmra.mxu0 %v167
    %v289 = vpop.f32.mrf.mxu0
    %v290 = vadd.f32 %v276, %v289
    %v291 = vpop.f32.mrf.mxu0
    %v292 = vadd.f32 %v278, %v291
    %293 = vdwg.mxu0
    %v326 = vunpack.c.l.b16 %v77
    %v327 = vunpack.c.l.b16 %v78
    %v328 = vunpack.c.l.b16 %v79
    %v329 = vunpack.c.l.b16 %v80
    %v330 = vunpack.c.l.b16 %v81
    %v331 = vunpack.c.l.b16 %v82
    %v332 = vunpack.c.l.b16 %v83
    %v333 = vunpack.c.l.b16 %v84
    %v334 = vunpack.c.l.b16 %v85
    %v335 = vunpack.c.l.b16 %v86
    %v336 = vunpack.c.l.b16 %v87
    %v337 = vunpack.c.l.b16 %v88
    %v338 = vunpack.c.l.b16 %v89
    %v339 = vunpack.c.l.b16 %v90
    %v340 = vunpack.c.l.b16 %v91
    %v341 = vunpack.c.l.b16 %v92
    %v342 = vunpack.c.l.b16 %v93
    %v343 = vunpack.c.l.b16 %v94
    %v344 = vunpack.c.l.b16 %v95
    %v345 = vunpack.c.l.b16 %v96
    %v346 = vunpack.c.l.b16 %v97
    %v347 = vunpack.c.l.b16 %v98
    %v348 = vunpack.c.l.b16 %v99
    %v349 = vunpack.c.l.b16 %v100
    %v350 = vunpack.c.l.b16 %v101
    %v351 = vunpack.c.l.b16 %v102
    %v352 = vunpack.c.l.b16 %v103
    %v353 = vunpack.c.l.b16 %v104
    %v354 = vunpack.c.l.b16 %v105
    %v355 = vunpack.c.l.b16 %v106
    %v356 = vunpack.c.l.b16 %v107
    %v357 = vunpack.c.l.b16 %v108
    %v358 = vpack.c.b16 %v327, %v326
    %v359 = vpack.c.b16 %v329, %v328
    %v360 = vpack.c.b16 %v331, %v330
    %v361 = vpack.c.b16 %v333, %v332
    %v362 = vpack.c.b16 %v335, %v334
    %v363 = vpack.c.b16 %v337, %v336
    %v364 = vpack.c.b16 %v339, %v338
    %v365 = vpack.c.b16 %v341, %v340
    %v366 = vpack.c.b16 %v343, %v342
    %v367 = vpack.c.b16 %v345, %v344
    %v368 = vpack.c.b16 %v347, %v346
    %v369 = vpack.c.b16 %v349, %v348
    %v370 = vpack.c.b16 %v351, %v350
    %v371 = vpack.c.b16 %v353, %v352
    %v372 = vpack.c.b16 %v355, %v354
    %v373 = vpack.c.b16 %v357, %v356
    %390 = vmatpush.bf16.msra.mxu0 %v365
    %391 = vmatpush.bf16.msra.mxu0 %v364
    %392 = vmatpush.bf16.msra.mxu0 %v363
    %393 = vmatpush.bf16.msra.mxu0 %v362
    %394 = vmatpush.bf16.msra.mxu0 %v361
    %395 = vmatpush.bf16.msra.mxu0 %v360
    %396 = vmatpush.bf16.msra.mxu0 %v359
    %397 = vmatpush.bf16.msra.mxu0 %v358
    %398 = vmatmul.bf16.gmra.mxu0 %v75
    %v399 = vpop.f32.mrf.mxu0
    %v400 = vadd.f32 %v290, %v399
    %v401 = vpop.f32.mrf.mxu0
    %v402 = vadd.f32 %v292, %v401
    %403 = vdwg.mxu0
    %404 = vmatpush.bf16.msra.mxu0 %v373
    %405 = vmatpush.bf16.msra.mxu0 %v372
    %406 = vmatpush.bf16.msra.mxu0 %v371
    %407 = vmatpush.bf16.msra.mxu0 %v370
    %408 = vmatpush.bf16.msra.mxu0 %v369
    %409 = vmatpush.bf16.msra.mxu0 %v368
    %410 = vmatpush.bf16.msra.mxu0 %v367
    %411 = vmatpush.bf16.msra.mxu0 %v366
    %412 = vmatmul.bf16.gmra.mxu0 %v76
    %v413 = vpop.f32.mrf.mxu0
    %v414 = vadd.f32 %v400, %v413
    %v415 = vpop.f32.mrf.mxu0
    %v416 = vadd.f32 %v402, %v415
    %417 = vdwg.mxu0
    %v418 = vpack.c.bf16 %v414, %v414
    %v419 = vpack.c.bf16 %v416, %v416
    %420 = vst [vmem:[#allocation8] sm:$0xf] %v418
    %421 = vst [vmem:[#allocation8 + $0x4] sm:$0xf] %v419
    // Predicated region
    $region26: #{tpu_custom_call.1} parent=1 // pred_check
      _
    $region27: #{tpu_custom_call.1} parent=1 // pred_check_branch
      %423 = sbr.rel (0) target = $region29
    $region28: #{tpu_custom_call.1} parent=1 // pred_region
      %425 = vsyncadd [#allocation4], 0
      %s426 = sshll.u32 [#allocation8], 4
      %s427 = int_to_ptr.vmem [resolvable:$true] %s426
      %s428 = sshll.u32 %s3, 4
      %s429 = int_to_ptr.hbm [resolvable:$true] %s428
      %434 = dma.vmem_to_hbm [thread:$0]  %s427, 128, %s429, [#allocation4], 64, 64, 4
    $region29: #{tpu_custom_call.1} parent=1 // pred_fallthru
      _
    // Predicated region
    $region30: #{tpu_custom_call.1} parent=1 // pred_check
      _
    $region31: #{tpu_custom_call.1} parent=1 // pred_check_branch
      %436 = sbr.rel (0) target = $region33
    $region32: #{tpu_custom_call.1} parent=1 // pred_region
      %438 = dma.done [#allocation4], 128
    $region33: #{tpu_custom_call.1} parent=1 // pred_fallthru
      _
    %439 = vsyncpa [#allocation3], 1
    %440 = vsyncpa [#allocation6], 1
    %441 = vsyncpa [#allocation4], 1

</llo_original>
